<compile_context>
chip_gen: v7x
topology: tpu7x:2x2x1
jax: 0.10.0
libtpu: 0.0.40
codegen_flags: <defaults>
</compile_context>

<pallas_src>
import jax
import jax.numpy as jnp
from jax.experimental import pallas as pl
from jax.experimental.pallas import tpu as pltpu


# ----------------------------------------------------------------------------
# Fused CALayer kernel (one image per grid step)
# ----------------------------------------------------------------------------
def _make_ca_kernel(H, W, C, C8):
    def kernel(x_ref, w1_ref, b1_ref, w2_ref, b2_ref, o_ref):
        # (H, W, C) -> (H*W, C): channels stay on lanes, H merges into sublanes.
        x = x_ref[...].reshape(H * W, C)

        # Global average pool over the spatial dims -> (1, C)  (sublane reduce).
        pooled = jnp.mean(x, axis=0, keepdims=True)

        # 1x1 conv C -> C//8 (+bias, ReLU):
        #   broadcast (1,C) over the (C8,C) weight, reduce over lanes.  Avoids
        #   a pathologically narrow M=1 MXU matmul.
        h = jnp.sum(pooled * w1_ref[...], axis=1, keepdims=True) + b1_ref[...]  # (C8, 1)
        h = jnp.maximum(h, 0.0)

        # 1x1 conv C//8 -> C (+bias, Sigmoid):
        #   broadcast (C8,1) over the (C8,C) weight, reduce over sublanes.
        y = jnp.sum(h * w2_ref[...], axis=0, keepdims=True) + b2_ref[...]       # (1, C)
        y = jax.nn.sigmoid(y)

        # Channel-wise rescale of the input (lane-aligned broadcast).
        o_ref[...] = (x * y).reshape(H, W, C)

    return kernel


def ca_layer_nhwc(x, w1, b1, w2, b2):
    """Fused CALayer on NHWC input.

    x : (N, H, W, C) f32
    w1: (C//8, C)  f32   -- PyTorch conv1 weight[:, :, 0, 0]
    b1: (C//8, 1)  f32   -- PyTorch conv1 bias
    w2: (C//8, C)  f32   -- PyTorch conv2 weight[:, :, 0, 0].T
    b2: (1, C)     f32   -- PyTorch conv2 bias
    returns (N, H, W, C) f32
    """
    N, H, W, C = x.shape
    C8 = w1.shape[0]
    kernel = _make_ca_kernel(H, W, C, C8)

    return pl.pallas_call(
        kernel,
        out_shape=jax.ShapeDtypeStruct((N, H, W, C), x.dtype),
        grid_spec=pltpu.PrefetchScalarGridSpec(
            num_scalar_prefetch=0,
            grid=(N,),
            in_specs=[
                pl.BlockSpec((None, H, W, C), lambda n: (n, 0, 0, 0)),
                pl.BlockSpec((C8, C), lambda n: (0, 0)),
                pl.BlockSpec((C8, 1), lambda n: (0, 0)),
                pl.BlockSpec((C8, C), lambda n: (0, 0)),
                pl.BlockSpec((1, C), lambda n: (0, 0)),
            ],
            out_specs=pl.BlockSpec((None, H, W, C), lambda n: (n, 0, 0, 0)),
        ),
        compiler_params=pltpu.CompilerParams(
            dimension_semantics=("parallel",)),
    )(x, w1, b1, w2, b2)


def ca_layer_forward(params, x_nchw):
    """NCHW wrapper matching the PyTorch CALayer.forward semantics."""
    w1, b1, w2, b2 = params
    x = jnp.transpose(x_nchw, (0, 2, 3, 1))           # NCHW -> NHWC (glue)
    y = ca_layer_nhwc(x, w1, b1, w2, b2)
    return jnp.transpose(y, (0, 3, 1, 2))             # NHWC -> NCHW (glue)


# ----------------------------------------------------------------------------
# Pure-JAX reference (for correctness checking)
# ----------------------------------------------------------------------------
def ca_layer_ref(params, x_nchw):
    w1, b1, w2, b2 = params
    pooled = jnp.mean(x_nchw, axis=(2, 3))                         # (N, C)
    h = jnp.maximum(pooled @ w1.T + b1.reshape(-1), 0.0)           # (N, C//8)
    y = jax.nn.sigmoid(h @ w2 + b2.reshape(-1))                    # (N, C)
    return x_nchw * y[:, :, None, None]


# ----------------------------------------------------------------------------
if __name__ == "__main__":
    key = jax.random.PRNGKey(0)
    kx, kw1, kb1, kw2, kb2 = jax.random.split(key, 5)

    N, C, H, W = 2, 64, 16, 16
    C8 = C // 8

    # NCHW input, exactly as in the PyTorch module.
    x = jax.random.normal(kx, (N, C, H, W), jnp.float32)

    # Deterministic synthetic parameters in the kernel's layouts
    # (w1 = conv1.weight[:, :, 0, 0]; w2 = conv2.weight[:, :, 0, 0].T).
    w1 = jax.random.normal(kw1, (C8, C), jnp.float32) * 0.05
    b1 = (jax.random.normal(kb1, (C8,), jnp.float32) * 0.01).reshape(C8, 1)
    w2 = jax.random.normal(kw2, (C8, C), jnp.float32) * 0.05
    b2 = (jax.random.normal(kb2, (C,), jnp.float32) * 0.01).reshape(1, C)
    params = (w1, b1, w2, b2)

    out = jax.jit(ca_layer_forward)(params, x)
    out = jax.block_until_ready(out)

    assert out.shape == (N, C, H, W), out.shape
    assert bool(jnp.all(jnp.isfinite(out)))

    ref = ca_layer_ref(params, x)
    assert bool(jnp.allclose(out, ref, atol=1e-4, rtol=1e-4))

    print("KERNEL_OK")
</pallas_src>

<mosaic_0001>
module attributes {stable_mosaic.version = 11 : i64} {
  func.func @kernel(%arg0: i32, %arg1: memref<1x16x16x64xf32, #tpu.memory_space<vmem>>, %arg2: memref<8x64xf32, #tpu.memory_space<vmem>>, %arg3: memref<8x1xf32, #tpu.memory_space<vmem>>, %arg4: memref<8x64xf32, #tpu.memory_space<vmem>>, %arg5: memref<1x64xf32, #tpu.memory_space<vmem>>, %arg6: memref<1x16x16x64xf32, #tpu.memory_space<vmem>>) attributes {dimension_semantics = [#tpu.dimension_semantics<parallel>], iteration_bounds = array<i64: 2>, scalar_prefetch = 0 : i64, scratch_operands = 0 : i64, tpu.core_type = #tpu.core_type<tc>, window_params = [{transform_indices = @transform_0, window_bounds = array<i64: 1, 16, 16, 64>}, {pipeline_mode = #tpu.pipeline_mode<synchronous>, transform_indices = @transform_1, window_bounds = array<i64: 8, 64>}, {pipeline_mode = #tpu.pipeline_mode<synchronous>, transform_indices = @transform_2, window_bounds = array<i64: 8, 1>}, {pipeline_mode = #tpu.pipeline_mode<synchronous>, transform_indices = @transform_3, window_bounds = array<i64: 8, 64>}, {pipeline_mode = #tpu.pipeline_mode<synchronous>, transform_indices = @transform_4, window_bounds = array<i64: 1, 64>}, {transform_indices = @transform_5, window_bounds = array<i64: 1, 16, 16, 64>}]} {
    %c0 = arith.constant 0 : index
    %c0_0 = arith.constant 0 : index
    %c0_1 = arith.constant 0 : index
    %c0_2 = arith.constant 0 : index
    %0 = vector.load %arg1[%c0, %c0_0, %c0_1, %c0_2] : memref<1x16x16x64xf32, #tpu.memory_space<vmem>>, vector<1x16x16x64xf32>
    %1 = vector.shape_cast %0 : vector<1x16x16x64xf32> to vector<16x16x64xf32>
    %2 = vector.shape_cast %1 : vector<16x16x64xf32> to vector<256x64xf32>
    %cst = arith.constant dense<0.000000e+00> : vector<64xf32>
    %3 = vector.multi_reduction <add>, %2, %cst [0] : vector<256x64xf32> to vector<64xf32>
    %4 = vector.shape_cast %3 : vector<64xf32> to vector<1x64xf32>
    %cst_3 = arith.constant 2.560000e+02 : f32
    %5 = vector.broadcast %cst_3 : f32 to vector<1x64xf32>
    %6 = arith.divf %4, %5 : vector<1x64xf32>
    %c0_4 = arith.constant 0 : index
    %c0_5 = arith.constant 0 : index
    %7 = vector.load %arg2[%c0_4, %c0_5] : memref<8x64xf32, #tpu.memory_space<vmem>>, vector<8x64xf32>
    %8 = vector.broadcast %6 : vector<1x64xf32> to vector<8x64xf32>
    %9 = arith.mulf %8, %7 : vector<8x64xf32>
    %cst_6 = arith.constant dense<0.000000e+00> : vector<8xf32>
    %10 = vector.multi_reduction <add>, %9, %cst_6 [1] : vector<8x64xf32> to vector<8xf32>
    %11 = vector.shape_cast %10 : vector<8xf32> to vector<8x1xf32>
    %c0_7 = arith.constant 0 : index
    %c0_8 = arith.constant 0 : index
    %12 = vector.load %arg3[%c0_7, %c0_8] : memref<8x1xf32, #tpu.memory_space<vmem>>, vector<8x1xf32>
    %13 = arith.addf %11, %12 : vector<8x1xf32>
    %cst_9 = arith.constant 0.000000e+00 : f32
    %14 = vector.broadcast %cst_9 : f32 to vector<8x1xf32>
    %15 = arith.maximumf %13, %14 : vector<8x1xf32>
    %c0_10 = arith.constant 0 : index
    %c0_11 = arith.constant 0 : index
    %16 = vector.load %arg4[%c0_10, %c0_11] : memref<8x64xf32, #tpu.memory_space<vmem>>, vector<8x64xf32>
    %17 = vector.broadcast %15 : vector<8x1xf32> to vector<8x64xf32>
    %18 = arith.mulf %17, %16 : vector<8x64xf32>
    %cst_12 = arith.constant dense<0.000000e+00> : vector<64xf32>
    %19 = vector.multi_reduction <add>, %18, %cst_12 [0] : vector<8x64xf32> to vector<64xf32>
    %20 = vector.shape_cast %19 : vector<64xf32> to vector<1x64xf32>
    %c0_13 = arith.constant 0 : index
    %c0_14 = arith.constant 0 : index
    %21 = vector.load %arg5[%c0_13, %c0_14] : memref<1x64xf32, #tpu.memory_space<vmem>>, vector<1x64xf32>
    %22 = arith.addf %20, %21 : vector<1x64xf32>
    %23 = arith.negf %22 : vector<1x64xf32>
    %24 = math.exp %23 : vector<1x64xf32>
    %cst_15 = arith.constant 1.000000e+00 : f32
    %25 = vector.broadcast %cst_15 : f32 to vector<1x64xf32>
    %26 = arith.addf %25, %24 : vector<1x64xf32>
    %27 = arith.divf %25, %26 : vector<1x64xf32>
    %28 = vector.broadcast %27 : vector<1x64xf32> to vector<256x64xf32>
    %29 = arith.mulf %2, %28 : vector<256x64xf32>
    %30 = vector.shape_cast %29 : vector<256x64xf32> to vector<16x16x64xf32>
    %c0_16 = arith.constant 0 : index
    %c0_17 = arith.constant 0 : index
    %c0_18 = arith.constant 0 : index
    %c0_19 = arith.constant 0 : index
    %31 = vector.load %arg6[%c0_16, %c0_17, %c0_18, %c0_19] : memref<1x16x16x64xf32, #tpu.memory_space<vmem>>, vector<1x16x16x64xf32>
    %32 = vector.shape_cast %31 : vector<1x16x16x64xf32> to vector<16x16x64xf32>
    %33 = vector.shape_cast %30 : vector<16x16x64xf32> to vector<1x16x16x64xf32>
    tpu.vector_store %arg6[%c0_16, %c0_17, %c0_18, %c0_19], %33 {strides = array<i32>} : memref<1x16x16x64xf32, #tpu.memory_space<vmem>>, vector<1x16x16x64xf32>,
    return
  }
  func.func @transform_0(%arg0: i32) -> (i32, i32, i32, i32) {
    %c0_i32 = arith.constant 0 : i32
    %c0_i32_0 = arith.constant 0 : i32
    %c0_i32_1 = arith.constant 0 : i32
    %c0_i32_2 = arith.constant 0 : i32
    return %arg0, %c0_i32, %c0_i32_0, %c0_i32_1 : i32, i32, i32, i32
  }
  func.func @transform_1(%arg0: i32) -> (i32, i32) {
    %c0_i32 = arith.constant 0 : i32
    %c0_i32_0 = arith.constant 0 : i32
    %c0_i32_1 = arith.constant 0 : i32
    return %c0_i32, %c0_i32_0 : i32, i32
  }
  func.func @transform_2(%arg0: i32) -> (i32, i32) {
    %c0_i32 = arith.constant 0 : i32
    %c0_i32_0 = arith.constant 0 : i32
    %c0_i32_1 = arith.constant 0 : i32
    return %c0_i32, %c0_i32_0 : i32, i32
  }
  func.func @transform_3(%arg0: i32) -> (i32, i32) {
    %c0_i32 = arith.constant 0 : i32
    %c0_i32_0 = arith.constant 0 : i32
    %c0_i32_1 = arith.constant 0 : i32
    return %c0_i32, %c0_i32_0 : i32, i32
  }
  func.func @transform_4(%arg0: i32) -> (i32, i32) {
    %c0_i32 = arith.constant 0 : i32
    %c0_i32_0 = arith.constant 0 : i32
    %c0_i32_1 = arith.constant 0 : i32
    return %c0_i32, %c0_i32_0 : i32, i32
  }
  func.func @transform_5(%arg0: i32) -> (i32, i32, i32, i32) {
    %c0_i32 = arith.constant 0 : i32
    %c0_i32_0 = arith.constant 0 : i32
    %c0_i32_1 = arith.constant 0 : i32
    %c0_i32_2 = arith.constant 0 : i32
    return %arg0, %c0_i32, %c0_i32_0, %c0_i32_1 : i32, i32, i32, i32
  }
}

</mosaic_0001>

<llo_original>
// kernel: ca_layer_forward.1
$region0: #{ca_layer_forward.1}
  #allocation0 [shape = 'u32[]', space=smem, size = 0x4, offset = 0x4, fixed_abs, tag = 'smem constant byte address 0x4 - core index']
  #allocation1 [shape = 'u32[144,128]{1,0:T(1,128)}', space=vmem, size = 0x12000, scoped, tag = 'internal scratch']
  %s0 = inlined_call_operand.hbm [shape: f32[2,16,16,64], index: 0, kind: input, shape index: {}]
  %s1 = inlined_call_operand.vmem [shape: f32[8,64], index: 1, kind: input, shape index: {}]
  %s2 = inlined_call_operand.vmem [shape: f32[8,1], index: 2, kind: input, shape index: {}]
  %s3 = inlined_call_operand.vmem [shape: f32[8,64], index: 3, kind: input, shape index: {}]
  %s4 = inlined_call_operand.vmem [shape: f32[1,64], index: 4, kind: input, shape index: {}]
  %s5 = inlined_call_operand.hbm [shape: f32[2,16,16,64], index: 5, kind: output, shape index: {}]
  %s6 = sld [smem:[#allocation0]]
  $region57: #{ca_layer_forward.1} parent=0
    _
  %s8 = ssub.s32 1, %s6
  %s9 = scalar_select 0, %s8, %s6
  $region1: #{ca_layer_forward.1} parent=0
    #allocation2 [shape = 'u8[262144]{0}', space=vmem, size = 0x40000, scoped, tag = 'input window, operand 0']
    #allocation3 [shape = 's32[2]{0}', space=sflag, size = 0x8, scoped, tag = 'scoped memory for ca_layer_forward.1']
    #allocation4 [shape = 's32[2]{0}', space=sflag, size = 0x8, scoped, tag = 'scoped memory for ca_layer_forward.1']
    #allocation5 [shape = 'u8[262144]{0}', space=vmem, size = 0x40000, scoped, tag = 'output window, operand 0']
    %10 = vsyncpa [#allocation3], 0
    %s11 = scalar_lea.sflag [#allocation3], 1
    %12 = vsyncpa %s11, 0
    %13 = vsyncpa [#allocation4], 0
    %s14 = scalar_lea.sflag [#allocation4], 1
    %15 = vsyncpa %s14, 0
    loop: start=0, step=1, limit=4
    $region2: #{ca_layer_forward.1} parent=1 // loop_pre_header
      _
    $region3: #{ca_layer_forward.1} parent=1 // loop_header
      %s17 = sphi 0, %s21
      %p18 = scmp.ge.s32.totalorder %s17, 4
      %s27 = sphi 0, %s29
      %s30 = sphi 0, %s27
      %s31 = sphi 0, %s30
      %s47 = sphi 0, %s31
      %s51 = sphi 0, %s51
      %s53 = sphi 0, %s51
      %s54 = sphi 0, %s53
      %s68 = sphi 0, %s54
      %s72 = sphi 0, %s72
      %s74 = sphi 0, %s72
      %s75 = sphi 0, %s74
      %s89 = sphi 0, %s75
      %s93 = sphi 0, %s93
      %s95 = sphi 0, %s93
      %s96 = sphi 0, %s95
      %s110 = sphi 0, %s96
      %s114 = sphi 0, %s114
      %s116 = sphi 0, %s114
      %s117 = sphi 0, %s116
      %s131 = sphi 0, %s117
      %s137 = sphi 0, %s139
      %s140 = sphi 0, %s137
      %s141 = sphi 0, %s140
      %s157 = sphi 0, %s141
    $region4: #{ca_layer_forward.1} parent=1 // loop_header_branch
      %20 = sbr.rel (%p18) target = $region8
    $region5: #{ca_layer_forward.1} parent=1 // loop_body
      %s22 = ssub.s32 %s17, 1
      %s23 = ssub.s32 %s17, 2
      %s24 = sadd.s32 %s17, 1
      %s25 = ssub.s32 %s17, %s24
      %p26 = scmp.eq.s32.totalorder %s25, 0
      %s28 = sadd.s32 %s27, 1
      %s29 = scalar_select %p26, %s27, %s28
      %p32 = pneg %p26
      %p33 = scmp.eq.s32.totalorder %s17, 1
      %p34 = por %p32, %p33
      %p35 = scmp.ne.s32.totalorder %s27, %s30
      %p36 = scmp.eq.s32.totalorder %s17, 0
      %p37 = por %p35, %p36
      %p38 = scmp.ne.s32.totalorder %s27, %s30
      %p39 = scmp.eq.s32.totalorder %s22, 1
      %p40 = por %p38, %p39
      %p41 = scmp.ne.s32.totalorder %s30, %s31
      %p42 = scmp.eq.s32.totalorder %s22, 0
      %p43 = por %p41, %p42
      %p44 = scmp.ne.s32.totalorder %s30, %s31
      %p45 = scmp.eq.s32.totalorder %s23, 1
      %p46 = por %p44, %p45
      %p48 = scmp.ne.s32.totalorder %s31, %s47
      %p49 = scmp.eq.s32.totalorder %s23, 0
      %p50 = por %p48, %p49
      %s52 = sadd.s32 %s51, 1
      %p55 = scmp.eq.s32.totalorder %s17, 1
      %p56 = scmp.ne.s32.totalorder %s51, %s53
      %p57 = scmp.eq.s32.totalorder %s17, 0
      %p58 = por %p56, %p57
      %p59 = scmp.ne.s32.totalorder %s51, %s53
      %p60 = scmp.eq.s32.totalorder %s22, 1
      %p61 = por %p59, %p60
      %p62 = scmp.ne.s32.totalorder %s53, %s54
      %p63 = scmp.eq.s32.totalorder %s22, 0
      %p64 = por %p62, %p63
      %p65 = scmp.ne.s32.totalorder %s53, %s54
      %p66 = scmp.eq.s32.totalorder %s23, 1
      %p67 = por %p65, %p66
      %p69 = scmp.ne.s32.totalorder %s54, %s68
      %p70 = scmp.eq.s32.totalorder %s23, 0
      %p71 = por %p69, %p70
      %s73 = sadd.s32 %s72, 1
      %p76 = scmp.eq.s32.totalorder %s17, 1
      %p77 = scmp.ne.s32.totalorder %s72, %s74
      %p78 = scmp.eq.s32.totalorder %s17, 0
      %p79 = por %p77, %p78
      %p80 = scmp.ne.s32.totalorder %s72, %s74
      %p81 = scmp.eq.s32.totalorder %s22, 1
      %p82 = por %p80, %p81
      %p83 = scmp.ne.s32.totalorder %s74, %s75
      %p84 = scmp.eq.s32.totalorder %s22, 0
      %p85 = por %p83, %p84
      %p86 = scmp.ne.s32.totalorder %s74, %s75
      %p87 = scmp.eq.s32.totalorder %s23, 1
      %p88 = por %p86, %p87
      %p90 = scmp.ne.s32.totalorder %s75, %s89
      %p91 = scmp.eq.s32.totalorder %s23, 0
      %p92 = por %p90, %p91
      %s94 = sadd.s32 %s93, 1
      %p97 = scmp.eq.s32.totalorder %s17, 1
      %p98 = scmp.ne.s32.totalorder %s93, %s95
      %p99 = scmp.eq.s32.totalorder %s17, 0
      %p100 = por %p98, %p99
      %p101 = scmp.ne.s32.totalorder %s93, %s95
      %p102 = scmp.eq.s32.totalorder %s22, 1
      %p103 = por %p101, %p102
      %p104 = scmp.ne.s32.totalorder %s95, %s96
      %p105 = scmp.eq.s32.totalorder %s22, 0
      %p106 = por %p104, %p105
      %p107 = scmp.ne.s32.totalorder %s95, %s96
      %p108 = scmp.eq.s32.totalorder %s23, 1
      %p109 = por %p107, %p108
      %p111 = scmp.ne.s32.totalorder %s96, %s110
      %p112 = scmp.eq.s32.totalorder %s23, 0
      %p113 = por %p111, %p112
      %s115 = sadd.s32 %s114, 1
      %p118 = scmp.eq.s32.totalorder %s17, 1
      %p119 = scmp.ne.s32.totalorder %s114, %s116
      %p120 = scmp.eq.s32.totalorder %s17, 0
      %p121 = por %p119, %p120
      %p122 = scmp.ne.s32.totalorder %s114, %s116
      %p123 = scmp.eq.s32.totalorder %s22, 1
      %p124 = por %p122, %p123
      %p125 = scmp.ne.s32.totalorder %s116, %s117
      %p126 = scmp.eq.s32.totalorder %s22, 0
      %p127 = por %p125, %p126
      %p128 = scmp.ne.s32.totalorder %s116, %s117
      %p129 = scmp.eq.s32.totalorder %s23, 1
      %p130 = por %p128, %p129
      %p132 = scmp.ne.s32.totalorder %s117, %s131
      %p133 = scmp.eq.s32.totalorder %s23, 0
      %p134 = por %p132, %p133
      %s135 = ssub.s32 %s17, %s24
      %p136 = scmp.eq.s32.totalorder %s135, 0
      %s138 = sadd.s32 %s137, 1
      %s139 = scalar_select %p136, %s137, %s138
      %p142 = pneg %p136
      %p143 = scmp.eq.s32.totalorder %s17, 1
      %p144 = por %p142, %p143
      %p145 = scmp.ne.s32.totalorder %s137, %s140
      %p146 = scmp.eq.s32.totalorder %s17, 0
      %p147 = por %p145, %p146
      %p148 = scmp.ne.s32.totalorder %s137, %s140
      %p149 = scmp.eq.s32.totalorder %s22, 1
      %p150 = por %p148, %p149
      %p151 = scmp.ne.s32.totalorder %s140, %s141
      %p152 = scmp.eq.s32.totalorder %s22, 0
      %p153 = por %p151, %p152
      %p154 = scmp.ne.s32.totalorder %s140, %s141
      %p155 = scmp.eq.s32.totalorder %s23, 1
      %p156 = por %p154, %p155
      %p158 = scmp.ne.s32.totalorder %s141, %s157
      %p159 = scmp.eq.s32.totalorder %s23, 0
      %p160 = por %p158, %p159
      %p161 = scmp.le.s32.totalorder 1, %s17
      %p162 = scmp.lt.s32.totalorder %s17, 3
      %p163 = pnand %p161, %p162
      %p164 = pneg %p163
      // Predicated region
      $region9: #{ca_layer_forward.1} parent=5 // pred_check
        _
      $region10: #{ca_layer_forward.1} parent=5 // pred_check_branch
        %166 = sbr.rel (%p163) target = $region12
      $region11: #{ca_layer_forward.1} parent=5 // pred_region
        %s167 = ssub.s32 %s17, 1
        // Predicated region
        $region13: #{ca_layer_forward.1} parent=11 // pred_check
          %p168 = pneg %p64
        $region14: #{ca_layer_forward.1} parent=11 // pred_check_branch
          %170 = sbr.rel (%p168) target = $region16
        $region15: #{ca_layer_forward.1} parent=11 // pred_region
          _
        $region16: #{ca_layer_forward.1} parent=11 // pred_fallthru
          _
        // Predicated region
        $region17: #{ca_layer_forward.1} parent=11 // pred_check
          %p171 = pneg %p85
        $region18: #{ca_layer_forward.1} parent=11 // pred_check_branch
          %173 = sbr.rel (%p171) target = $region20
        $region19: #{ca_layer_forward.1} parent=11 // pred_region
          _
        $region20: #{ca_layer_forward.1} parent=11 // pred_fallthru
          _
        // Predicated region
        $region21: #{ca_layer_forward.1} parent=11 // pred_check
          %p174 = pneg %p106
        $region22: #{ca_layer_forward.1} parent=11 // pred_check_branch
          %176 = sbr.rel (%p174) target = $region24
        $region23: #{ca_layer_forward.1} parent=11 // pred_region
          _
        $region24: #{ca_layer_forward.1} parent=11 // pred_fallthru
          _
        // Predicated region
        $region25: #{ca_layer_forward.1} parent=11 // pred_check
          %p177 = pneg %p127
        $region26: #{ca_layer_forward.1} parent=11 // pred_check_branch
          %179 = sbr.rel (%p177) target = $region28
        $region27: #{ca_layer_forward.1} parent=11 // pred_region
          _
        $region28: #{ca_layer_forward.1} parent=11 // pred_fallthru
          _
      $region12: #{ca_layer_forward.1} parent=5 // pred_fallthru
        _
      %p180 = scmp.lt.s32.totalorder %s17, 2
      // Predicated region
      $region29: #{ca_layer_forward.1} parent=5 // pred_check
        %p181 = pneg %p180
      $region30: #{ca_layer_forward.1} parent=5 // pred_check_branch
        %183 = sbr.rel (%p181) target = $region32
      $region31: #{ca_layer_forward.1} parent=5 // pred_region
        // Predicated region
        $region33: #{ca_layer_forward.1} parent=31 // pred_check
          %p184 = pneg %p37
        $region34: #{ca_layer_forward.1} parent=31 // pred_check_branch
          %186 = sbr.rel (%p184) target = $region36
        $region35: #{ca_layer_forward.1} parent=31 // pred_region
          %s187 = sand.u32 %s27, 1
          %s188 = scalar_lea.sflag [#allocation3], %s187
          %s189 = sand.u32 %s27, 1
          %s190 = smul.addr %s189, 256
          %s191 = scalar_lea.vmem [#allocation2], %s190
          %s193 = ssub.s32 4096, 4096
          %194 = vsyncadd %s188, %s193
          %s195 = smul.addr %s17, 32
          %s196 = smul.addr %s195, 128
          %s197 = scalar_lea.hbm %s0, %s196
          %s198 = sshll.u32 %s191, 4
          %s199 = int_to_ptr.vmem [resolvable:$true] %s198
          %204 = dma.hbm_to_vmem [thread:$0]  %s197, 4096, %s199, %s188, 128, 128, 8
        $region36: #{ca_layer_forward.1} parent=31 // pred_fallthru
          _
      $region32: #{ca_layer_forward.1} parent=5 // pred_fallthru
        _
      %p205 = scmp.le.s32.totalorder 1, %s17
      %p206 = scmp.lt.s32.totalorder %s17, 3
      %p207 = pnand %p205, %p206
      %p208 = pneg %p207
      // Predicated region
      $region37: #{ca_layer_forward.1} parent=5 // pred_check
        _
      $region38: #{ca_layer_forward.1} parent=5 // pred_check_branch
        %210 = sbr.rel (%p207) target = $region40
      $region39: #{ca_layer_forward.1} parent=5 // pred_region
        %s211 = ssub.s32 %s17, 1
        %s212 = sand.u32 %s30, 1
        %s213 = scalar_lea.sflag [#allocation3], %s212
        %s214 = sand.u32 %s30, 1
        %s215 = smul.addr %s214, 256
        %s216 = scalar_lea.vmem [#allocation2], %s215
        // Predicated region
        $region41: #{ca_layer_forward.1} parent=39 // pred_check
          %p217 = pneg %p43
        $region42: #{ca_layer_forward.1} parent=39 // pred_check_branch
          %219 = sbr.rel (%p217) target = $region44
        $region43: #{ca_layer_forward.1} parent=39 // pred_region
          %220 = dma.done %s213, 4096
        $region44: #{ca_layer_forward.1} parent=39 // pred_fallthru
          _
        %s221 = sand.u32 %s30, 1
        %s222 = scalar_lea.sflag [#allocation3], %s221
        %s223 = sand.u32 %s30, 1
        %s224 = smul.addr %s223, 256
        %s225 = scalar_lea.vmem [#allocation2], %s224
        %p226 = pneg %p43
        %p227 = pneg %p40
        %p228 = pneg %p64
        %p229 = pneg %p61
        %p230 = pneg %p85
        %p231 = pneg %p82
        %p232 = pneg %p106
        %p233 = pneg %p103
        %p234 = pneg %p127
        %p235 = pneg %p124
        %p236 = pneg %p153
        %p237 = pneg %p150
        %s238 = sand.u32 %s140, 1
        %s239 = scalar_lea.sflag [#allocation4], %s238
        %s240 = sand.u32 %s140, 1
        %s241 = smul.addr %s240, 256
        %s242 = scalar_lea.vmem [#allocation5], %s241
        %v243 = vld [vmem:[%s216] sm:$0xff]
        %v244 = vld [vmem:[%s216 + $0x8] sm:$0xff]
        %v245 = vld [vmem:[%s216 + $0x10] sm:$0xff]
        %v246 = vld [vmem:[%s216 + $0x18] sm:$0xff]
        %v247 = vld [vmem:[%s216 + $0x20] sm:$0xff]
        %v248 = vld [vmem:[%s216 + $0x28] sm:$0xff]
        %v249 = vld [vmem:[%s216 + $0x30] sm:$0xff]
        %v250 = vld [vmem:[%s216 + $0x38] sm:$0xff]
        %v251 = vld [vmem:[%s216 + $0x40] sm:$0xff]
        %v252 = vld [vmem:[%s216 + $0x48] sm:$0xff]
        %v253 = vld [vmem:[%s216 + $0x50] sm:$0xff]
        %v254 = vld [vmem:[%s216 + $0x58] sm:$0xff]
        %v255 = vld [vmem:[%s216 + $0x60] sm:$0xff]
        %v256 = vld [vmem:[%s216 + $0x68] sm:$0xff]
        %v257 = vld [vmem:[%s216 + $0x70] sm:$0xff]
        %v258 = vld [vmem:[%s216 + $0x78] sm:$0xff]
        %v259 = vld [vmem:[%s216 + $0x80] sm:$0xff]
        %v260 = vld [vmem:[%s216 + $0x88] sm:$0xff]
        %v261 = vld [vmem:[%s216 + $0x90] sm:$0xff]
        %v262 = vld [vmem:[%s216 + $0x98] sm:$0xff]
        %v263 = vld [vmem:[%s216 + $0xa0] sm:$0xff]
        %v264 = vld [vmem:[%s216 + $0xa8] sm:$0xff]
        %v265 = vld [vmem:[%s216 + $0xb0] sm:$0xff]
        %v266 = vld [vmem:[%s216 + $0xb8] sm:$0xff]
        %v267 = vld [vmem:[%s216 + $0xc0] sm:$0xff]
        %v268 = vld [vmem:[%s216 + $0xc8] sm:$0xff]
        %v269 = vld [vmem:[%s216 + $0xd0] sm:$0xff]
        %v270 = vld [vmem:[%s216 + $0xd8] sm:$0xff]
        %v271 = vld [vmem:[%s216 + $0xe0] sm:$0xff]
        %v272 = vld [vmem:[%s216 + $0xe8] sm:$0xff]
        %v273 = vld [vmem:[%s216 + $0xf0] sm:$0xff]
        %v274 = vld [vmem:[%s216 + $0xf8] sm:$0xff]
        %vm275 = vcmask 523264
        %v276 = vsel %vm275, %v243, 0.0
        %v277 = vsel %vm275, %v244, 0.0
        %v278 = vadd.f32 %v276, %v277
        %v279 = vsel %vm275, %v245, 0.0
        %v280 = vadd.f32 %v278, %v279
        %v281 = vsel %vm275, %v246, 0.0
        %v282 = vadd.f32 %v280, %v281
        %v283 = vsel %vm275, %v247, 0.0
        %v284 = vadd.f32 %v282, %v283
        %v285 = vsel %vm275, %v248, 0.0
        %v286 = vadd.f32 %v284, %v285
        %v287 = vsel %vm275, %v249, 0.0
        %v288 = vadd.f32 %v286, %v287
        %v289 = vsel %vm275, %v250, 0.0
        %v290 = vadd.f32 %v288, %v289
        %v291 = vsel %vm275, %v251, 0.0
        %v292 = vadd.f32 %v290, %v291
        %v293 = vsel %vm275, %v252, 0.0
        %v294 = vadd.f32 %v292, %v293
        %v295 = vsel %vm275, %v253, 0.0
        %v296 = vadd.f32 %v294, %v295
        %v297 = vsel %vm275, %v254, 0.0
        %v298 = vadd.f32 %v296, %v297
        %v299 = vsel %vm275, %v255, 0.0
        %v300 = vadd.f32 %v298, %v299
        %v301 = vsel %vm275, %v256, 0.0
        %v302 = vadd.f32 %v300, %v301
        %v303 = vsel %vm275, %v257, 0.0
        %v304 = vadd.f32 %v302, %v303
        %v305 = vsel %vm275, %v258, 0.0
        %v306 = vadd.f32 %v304, %v305
        %v307 = vsel %vm275, %v259, 0.0
        %v308 = vadd.f32 %v306, %v307
        %v309 = vsel %vm275, %v260, 0.0
        %v310 = vadd.f32 %v308, %v309
        %v311 = vsel %vm275, %v261, 0.0
        %v312 = vadd.f32 %v310, %v311
        %v313 = vsel %vm275, %v262, 0.0
        %v314 = vadd.f32 %v312, %v313
        %v315 = vsel %vm275, %v263, 0.0
        %v316 = vadd.f32 %v314, %v315
        %v317 = vsel %vm275, %v264, 0.0
        %v318 = vadd.f32 %v316, %v317
        %v319 = vsel %vm275, %v265, 0.0
        %v320 = vadd.f32 %v318, %v319
        %v321 = vsel %vm275, %v266, 0.0
        %v322 = vadd.f32 %v320, %v321
        %v323 = vsel %vm275, %v267, 0.0
        %v324 = vadd.f32 %v322, %v323
        %v325 = vsel %vm275, %v268, 0.0
        %v326 = vadd.f32 %v324, %v325
        %v327 = vsel %vm275, %v269, 0.0
        %v328 = vadd.f32 %v326, %v327
        %v329 = vsel %vm275, %v270, 0.0
        %v330 = vadd.f32 %v328, %v329
        %v331 = vsel %vm275, %v271, 0.0
        %v332 = vadd.f32 %v330, %v331
        %v333 = vsel %vm275, %v272, 0.0
        %v334 = vadd.f32 %v332, %v333
        %v335 = vsel %vm275, %v273, 0.0
        %v336 = vadd.f32 %v334, %v335
        %v337 = vsel %vm275, %v274, 0.0
        %v338 = vadd.f32 %v336, %v337
        %v339 = vrot.slane %v338, 4
        %v340 = vadd.f32 %v338, %v339
        %v341 = vrot.slane %v340, 2
        %v342 = vadd.f32 %v340, %v341
        %v343 = vrot.slane %v342, 1
        %v344 = vadd.f32 %v342, %v343
        %v345 = vrcp.pop 256.0
        %v346 = vmul.f32 %v344, %v345
        %v347 = vld [vmem:[%s1] sm:$0xff]
        %v348 = vmul.f32 %v346, %v347
        %v349 = vsel %vm275, %v348, 0.0
        %350 = vadd.xlane.f32.xlu0 %v349
        %v351 = vpop.xlane.xlu0 %350
        %v352 = vld [vmem:[%s2] sm:$0xff]
        %v353 = vadd.f32 %v351, %v352
        %v354 = vmax.f32 %v353, 0.0
        %v355 = vld [vmem:[%s3] sm:$0xff]
        %357 = vset.pattern.permute.xlu0 0
        %358 = vperm.xlu0 %357, %v354
        %v359 = vpop.permute.xlu0 %358
        %v361 = vmul.f32 %v359, %v355
        %v362 = vsel %vm275, %v361, 0.0
        %v363 = vrot.slane %v362, 4
        %v364 = vadd.f32 %v362, %v363
        %v365 = vrot.slane %v364, 2
        %v366 = vadd.f32 %v364, %v365
        %v367 = vrot.slane %v366, 1
        %v368 = vadd.f32 %v366, %v367
        %v369 = vld [vmem:[%s4] sm:$0x1]
        %v370 = vadd.f32 %v368, %v369
        %v371 = vxor.u32 %v370, 2147483648
        %v372 = vmul.f32 %v371, 1.442695
        %v373 = vpow.pop %v372
        %v374 = vadd.f32 %v373, 1.0
        %v375 = vrcp.pop %v374
        %v376 = vmul.f32 1.0, %v375
        %v377 = vlaneseq
        %v378 = vshrl.u32 %v377, 7
        %v379 = vsub.s32 0, %v378
        %v380 = vrot.slane %v376, %v379
        %v381 = vmul.f32 %v243, %v380
        %v382 = vmul.f32 %v244, %v380
        %v383 = vmul.f32 %v245, %v380
        %v384 = vmul.f32 %v246, %v380
        %v385 = vmul.f32 %v247, %v380
        %v386 = vmul.f32 %v248, %v380
        %v387 = vmul.f32 %v249, %v380
        %v388 = vmul.f32 %v250, %v380
        %v389 = vmul.f32 %v251, %v380
        %v390 = vmul.f32 %v252, %v380
        %v391 = vmul.f32 %v253, %v380
        %v392 = vmul.f32 %v254, %v380
        %v393 = vmul.f32 %v255, %v380
        %v394 = vmul.f32 %v256, %v380
        %v395 = vmul.f32 %v257, %v380
        %v396 = vmul.f32 %v258, %v380
        %v397 = vmul.f32 %v259, %v380
        %v398 = vmul.f32 %v260, %v380
        %v399 = vmul.f32 %v261, %v380
        %v400 = vmul.f32 %v262, %v380
        %v401 = vmul.f32 %v263, %v380
        %v402 = vmul.f32 %v264, %v380
        %v403 = vmul.f32 %v265, %v380
        %v404 = vmul.f32 %v266, %v380
        %v405 = vmul.f32 %v267, %v380
        %v406 = vmul.f32 %v268, %v380
        %v407 = vmul.f32 %v269, %v380
        %v408 = vmul.f32 %v270, %v380
        %v409 = vmul.f32 %v271, %v380
        %v410 = vmul.f32 %v272, %v380
        %v411 = vmul.f32 %v273, %v380
        %v412 = vmul.f32 %v274, %v380
        %413 = vst.msk [vmem:[%s242] sm:$0xff] %vm275, %v381
        %414 = vst.msk [vmem:[%s242 + $0x8] sm:$0xff] %vm275, %v382
        %415 = vst.msk [vmem:[%s242 + $0x10] sm:$0xff] %vm275, %v383
        %416 = vst.msk [vmem:[%s242 + $0x18] sm:$0xff] %vm275, %v384
        %417 = vst.msk [vmem:[%s242 + $0x20] sm:$0xff] %vm275, %v385
        %418 = vst.msk [vmem:[%s242 + $0x28] sm:$0xff] %vm275, %v386
        %419 = vst.msk [vmem:[%s242 + $0x30] sm:$0xff] %vm275, %v387
        %420 = vst.msk [vmem:[%s242 + $0x38] sm:$0xff] %vm275, %v388
        %421 = vst.msk [vmem:[%s242 + $0x40] sm:$0xff] %vm275, %v389
        %422 = vst.msk [vmem:[%s242 + $0x48] sm:$0xff] %vm275, %v390
        %423 = vst.msk [vmem:[%s242 + $0x50] sm:$0xff] %vm275, %v391
        %424 = vst.msk [vmem:[%s242 + $0x58] sm:$0xff] %vm275, %v392
        %425 = vst.msk [vmem:[%s242 + $0x60] sm:$0xff] %vm275, %v393
        %426 = vst.msk [vmem:[%s242 + $0x68] sm:$0xff] %vm275, %v394
        %427 = vst.msk [vmem:[%s242 + $0x70] sm:$0xff] %vm275, %v395
        %428 = vst.msk [vmem:[%s242 + $0x78] sm:$0xff] %vm275, %v396
        %429 = vst.msk [vmem:[%s242 + $0x80] sm:$0xff] %vm275, %v397
        %430 = vst.msk [vmem:[%s242 + $0x88] sm:$0xff] %vm275, %v398
        %431 = vst.msk [vmem:[%s242 + $0x90] sm:$0xff] %vm275, %v399
        %432 = vst.msk [vmem:[%s242 + $0x98] sm:$0xff] %vm275, %v400
        %433 = vst.msk [vmem:[%s242 + $0xa0] sm:$0xff] %vm275, %v401
        %434 = vst.msk [vmem:[%s242 + $0xa8] sm:$0xff] %vm275, %v402
        %435 = vst.msk [vmem:[%s242 + $0xb0] sm:$0xff] %vm275, %v403
        %436 = vst.msk [vmem:[%s242 + $0xb8] sm:$0xff] %vm275, %v404
        %437 = vst.msk [vmem:[%s242 + $0xc0] sm:$0xff] %vm275, %v405
        %438 = vst.msk [vmem:[%s242 + $0xc8] sm:$0xff] %vm275, %v406
        %439 = vst.msk [vmem:[%s242 + $0xd0] sm:$0xff] %vm275, %v407
        %440 = vst.msk [vmem:[%s242 + $0xd8] sm:$0xff] %vm275, %v408
        %441 = vst.msk [vmem:[%s242 + $0xe0] sm:$0xff] %vm275, %v409
        %442 = vst.msk [vmem:[%s242 + $0xe8] sm:$0xff] %vm275, %v410
        %443 = vst.msk [vmem:[%s242 + $0xf0] sm:$0xff] %vm275, %v411
        %444 = vst.msk [vmem:[%s242 + $0xf8] sm:$0xff] %vm275, %v412
        %s445 = sand.u32 %s140, 1
        %s446 = scalar_lea.sflag [#allocation4], %s445
        %s447 = sand.u32 %s140, 1
        %s448 = smul.addr %s447, 256
        %s449 = scalar_lea.vmem [#allocation5], %s448
        // Predicated region
        $region45: #{ca_layer_forward.1} parent=39 // pred_check
          %p450 = pneg %p150
        $region46: #{ca_layer_forward.1} parent=39 // pred_check_branch
          %452 = sbr.rel (%p450) target = $region48
        $region47: #{ca_layer_forward.1} parent=39 // pred_region
          %s454 = ssub.s32 4096, 4096
          %455 = vsyncadd %s446, %s454
          %s456 = smul.addr %s22, 32
          %s457 = smul.addr %s456, 128
          %s458 = scalar_lea.hbm %s5, %s457
          %s459 = sshll.u32 %s449, 4
          %s460 = int_to_ptr.vmem [resolvable:$true] %s459
          %465 = dma.vmem_to_hbm [thread:$0]  %s460, 4096, %s458, %s446, 128, 128, 8
        $region48: #{ca_layer_forward.1} parent=39 // pred_fallthru
          _
      $region40: #{ca_layer_forward.1} parent=5 // pred_fallthru
        _
      %p466 = scmp.le.s32.totalorder 2, %s17
      // Predicated region
      $region49: #{ca_layer_forward.1} parent=5 // pred_check
        %p467 = pneg %p466
      $region50: #{ca_layer_forward.1} parent=5 // pred_check_branch
        %469 = sbr.rel (%p467) target = $region52
      $region51: #{ca_layer_forward.1} parent=5 // pred_region
        %s470 = ssub.s32 %s17, 2
        // Predicated region
        $region53: #{ca_layer_forward.1} parent=51 // pred_check
          %p471 = pneg %p156
        $region54: #{ca_layer_forward.1} parent=51 // pred_check_branch
          %473 = sbr.rel (%p471) target = $region56
        $region55: #{ca_layer_forward.1} parent=51 // pred_region
          %s474 = sand.u32 %s141, 1
          %s475 = scalar_lea.sflag [#allocation4], %s474
          %s476 = sand.u32 %s141, 1
          %s477 = smul.addr %s476, 256
          %s478 = scalar_lea.vmem [#allocation5], %s477
          %479 = dma.done %s475, 4096
        $region56: #{ca_layer_forward.1} parent=51 // pred_fallthru
          _
      $region52: #{ca_layer_forward.1} parent=5 // pred_fallthru
        _
    $region6: #{ca_layer_forward.1} parent=1 // loop_footer
      %s21 = sadd.s32 1, %s17
    $region7: #{ca_layer_forward.1} parent=1 // loop_footer_branch
      %16 = sbr.rel target = $region3
    $region8: #{ca_layer_forward.1} parent=1 // loop_exit
      _
    %480 = vsyncpa [#allocation3], 1
    %s481 = scalar_lea.sflag [#allocation3], 1
    %482 = vsyncpa %s481, 1
    %483 = vsyncpa [#allocation4], 1
    %s484 = scalar_lea.sflag [#allocation4], 1
    %485 = vsyncpa %s484, 1

</llo_original>
